<compile_context>
chip_gen: v7x
topology: tpu7x:2x2x1
jax: 0.10.0
libtpu: 0.0.40
codegen_flags: <defaults>
</compile_context>

<pallas_src>
import jax
import jax.numpy as jnp
from jax.experimental import pallas as pl
from jax.experimental.pallas import tpu as pltpu


def _round_up(n, m):
    return ((n + m - 1) // m) * m


def mlp_kernel(x_ref, w1_ref, b1_ref, w2_ref, b2_ref, out_ref):
    # layer1: h = relu(x @ W1p + b1), W1p already transposed/padded to [in, hid_p].
    h = jnp.dot(x_ref[...], w1_ref[...], preferred_element_type=jnp.float32)
    h = jnp.maximum(h + b1_ref[...], 0.0)            # b1 is [1, hid_p] -> broadcasts

    # layer2: out = h @ W2p + b2, W2p already transposed to [hid_p, output_dim].
    # Padded hidden rows of W2p are zero, so they contribute nothing.
    o = jnp.dot(h.astype(w2_ref.dtype), w2_ref[...], preferred_element_type=jnp.float32)
    out_ref[...] = (o + b2_ref[...]).astype(out_ref.dtype)


def pack_params(w1, b1, w2, b2, *, dtype=jnp.float32):
    """One-time packing of PyTorch-layout params.

    w1: [hidden_dim, input_dim], b1: [hidden_dim]
    w2: [output_dim, hidden_dim], b2: [output_dim]

    Weights are transposed to the MXU-preferred [K, N] layout and the hidden
    dim is zero-padded to a multiple of 128 lanes.  The output dim is left
    unpadded so the kernel's HBM writeback stays minimal.  Do this once
    outside the hot path and reuse the packed params.
    """
    hidden_dim, input_dim = w1.shape
    output_dim, _ = w2.shape
    hid_p = _round_up(hidden_dim, 128)

    w1p = jnp.pad(w1.T, ((0, 0), (0, hid_p - hidden_dim))).astype(dtype)   # [in, hid_p]
    w2p = jnp.pad(w2.T, ((0, hid_p - hidden_dim), (0, 0))).astype(dtype)   # [hid_p, out]
    b1p = jnp.pad(b1, (0, hid_p - hidden_dim)).reshape(1, hid_p).astype(dtype)
    b2p = b2.reshape(1, output_dim).astype(dtype)
    return (w1p, b1p, w2p, b2p)


def mlp_forward(x, packed, *, block_rows=512):
    """relu(x @ w1.T + b1) @ w2.T + b2, batch-tiled Pallas pipeline.

    x: [B, input_dim];  packed = pack_params(...) output.
    """
    w1p, b1p, w2p, b2p = packed
    B, input_dim = x.shape
    assert w1p.shape[0] == input_dim
    hid_p = w1p.shape[1]
    output_dim = w2p.shape[1]

    # Pad batch only to the 8-sublane granule (never to a full tile).
    b_pad = _round_up(B, 8)
    xp = x if b_pad == B else jnp.pad(x, ((0, b_pad - B), (0, 0)))

    # Adaptive tile: aim for ~8 grid steps (>=3-4 per TensorCore on v7x megacore)
    # while keeping tiles large (<=block_rows) for big batches.
    tm = min(block_rows, max(8, _round_up(pl.cdiv(b_pad, 8), 8)))
    grid = (pl.cdiv(b_pad, tm),)

    itemsize = jnp.dtype(x.dtype).itemsize
    flops = 2 * b_pad * (input_dim * hid_p + hid_p * output_dim)
    bytes_accessed = (xp.size + w1p.size + b1p.size + w2p.size + b2p.size
                      + b_pad * output_dim) * itemsize

    out = pl.pallas_call(
        mlp_kernel,
        out_shape=jax.ShapeDtypeStruct((b_pad, output_dim), x.dtype),
        grid=grid,
        in_specs=[
            # activations: streamed per batch tile (double-buffered DMA)
            pl.BlockSpec((tm, input_dim), lambda i: (i, 0)),
            # weights / biases: constant index_map -> loaded once, VMEM-resident
            pl.BlockSpec((input_dim, hid_p), lambda i: (0, 0)),
            pl.BlockSpec((1, hid_p), lambda i: (0, 0)),
            pl.BlockSpec((hid_p, output_dim), lambda i: (0, 0)),
            pl.BlockSpec((1, output_dim), lambda i: (0, 0)),
        ],
        # output last dim equals the full array dim -> legal block, minimal writeback
        out_specs=pl.BlockSpec((tm, output_dim), lambda i: (i, 0)),
        compiler_params=pltpu.CompilerParams(
            # batch tiles are independent -> megacore-shardable on v7x
            dimension_semantics=("parallel",),
        ),
        cost_estimate=pl.CostEstimate(
            flops=flops, transcendentals=0, bytes_accessed=bytes_accessed),
    )(xp, w1p, b1p, w2p, b2p)

    return out[:B] if b_pad != B else out


def reference_forward(x, w1, b1, w2, b2):
    h = jnp.maximum(x @ w1.T + b1, 0.0)
    return h @ w2.T + b2


if __name__ == "__main__":
    # Shapes consistent with MLP(input_dim, output_dim, hidden_dim) for CartPole-ish RL.
    batch = 1024          # -> tm=128, grid=(8,): several pipelined steps per core
    input_dim = 4         # observation dim
    output_dim = 2        # action dim (unpadded output path exercised)
    hidden_dim = 32       # padded to 128 lanes inside pack_params

    key = jax.random.PRNGKey(0)
    kx, k1, k2, k3, k4 = jax.random.split(key, 5)

    x = jax.random.normal(kx, (batch, input_dim), dtype=jnp.float32)
    bound1 = 1.0 / jnp.sqrt(input_dim)
    bound2 = 1.0 / jnp.sqrt(hidden_dim)
    w1 = jax.random.uniform(k1, (hidden_dim, input_dim), jnp.float32, -bound1, bound1)
    b1 = jax.random.uniform(k2, (hidden_dim,), jnp.float32, -bound1, bound1)
    w2 = jax.random.uniform(k3, (output_dim, hidden_dim), jnp.float32, -bound2, bound2)
    b2 = jax.random.uniform(k4, (output_dim,), jnp.float32, -bound2, bound2)

    packed = pack_params(w1, b1, w2, b2)   # one-time packing; hot path reuses it
    out = mlp_forward(x, packed)
    out = jax.block_until_ready(out)

    ref = reference_forward(x, w1, b1, w2, b2)
    assert out.shape == (batch, output_dim)
    assert jnp.allclose(out, ref, atol=1e-4, rtol=1e-4), "Pallas output mismatch"

    print("KERNEL_OK")
</pallas_src>

<mosaic_0001>
module attributes {stable_mosaic.version = 11 : i64} {
  func.func @mlp_kernel(%arg0: i32, %arg1: memref<128x4xf32, #tpu.memory_space<vmem>>, %arg2: memref<4x128xf32, #tpu.memory_space<vmem>>, %arg3: memref<1x128xf32, #tpu.memory_space<vmem>>, %arg4: memref<128x2xf32, #tpu.memory_space<vmem>>, %arg5: memref<1x2xf32, #tpu.memory_space<vmem>>, %arg6: memref<128x2xf32, #tpu.memory_space<vmem>>) attributes {dimension_semantics = [#tpu.dimension_semantics<parallel>], iteration_bounds = array<i64: 8>, scalar_prefetch = 0 : i64, scratch_operands = 0 : i64, tpu.core_type = #tpu.core_type<tc>, window_params = [{transform_indices = @transform_0, window_bounds = array<i64: 128, 4>}, {pipeline_mode = #tpu.pipeline_mode<synchronous>, transform_indices = @transform_1, window_bounds = array<i64: 4, 128>}, {pipeline_mode = #tpu.pipeline_mode<synchronous>, transform_indices = @transform_2, window_bounds = array<i64: 1, 128>}, {pipeline_mode = #tpu.pipeline_mode<synchronous>, transform_indices = @transform_3, window_bounds = array<i64: 128, 2>}, {pipeline_mode = #tpu.pipeline_mode<synchronous>, transform_indices = @transform_4, window_bounds = array<i64: 1, 2>}, {transform_indices = @transform_5, window_bounds = array<i64: 128, 2>}]} {
    %c0 = arith.constant 0 : index
    %c0_0 = arith.constant 0 : index
    %0 = vector.load %arg1[%c0, %c0_0] : memref<128x4xf32, #tpu.memory_space<vmem>>, vector<128x4xf32>
    %c0_1 = arith.constant 0 : index
    %c0_2 = arith.constant 0 : index
    %1 = vector.load %arg2[%c0_1, %c0_2] : memref<4x128xf32, #tpu.memory_space<vmem>>, vector<4x128xf32>
    %cst = arith.constant dense<0.000000e+00> : vector<128x128xf32>
    %2 = tpu.matmul %0, %1, %cst {dimension_numbers = #tpu.dot_dimension_numbers<[1], [0], [0], [1], [0, 0, 1, 1], [], []>} : vector<128x4xf32>, vector<4x128xf32>, vector<128x128xf32> -> vector<128x128xf32>
    %c0_3 = arith.constant 0 : index
    %c0_4 = arith.constant 0 : index
    %3 = vector.load %arg3[%c0_3, %c0_4] : memref<1x128xf32, #tpu.memory_space<vmem>>, vector<1x128xf32>
    %4 = vector.broadcast %3 : vector<1x128xf32> to vector<128x128xf32>
    %5 = arith.addf %2, %4 : vector<128x128xf32>
    %cst_5 = arith.constant 0.000000e+00 : f32
    %6 = vector.broadcast %cst_5 : f32 to vector<128x128xf32>
    %7 = arith.maximumf %5, %6 : vector<128x128xf32>
    %c0_6 = arith.constant 0 : index
    %c0_7 = arith.constant 0 : index
    %8 = vector.load %arg4[%c0_6, %c0_7] : memref<128x2xf32, #tpu.memory_space<vmem>>, vector<128x2xf32>
    %cst_8 = arith.constant dense<0.000000e+00> : vector<128x2xf32>
    %9 = tpu.matmul %7, %8, %cst_8 {dimension_numbers = #tpu.dot_dimension_numbers<[1], [0], [0], [1], [0, 0, 1, 1], [], []>} : vector<128x128xf32>, vector<128x2xf32>, vector<128x2xf32> -> vector<128x2xf32>
    %c0_9 = arith.constant 0 : index
    %c0_10 = arith.constant 0 : index
    %10 = vector.load %arg5[%c0_9, %c0_10] : memref<1x2xf32, #tpu.memory_space<vmem>>, vector<1x2xf32>
    %11 = vector.broadcast %10 : vector<1x2xf32> to vector<128x2xf32>
    %12 = arith.addf %9, %11 : vector<128x2xf32>
    %c0_11 = arith.constant 0 : index
    %c0_12 = arith.constant 0 : index
    %13 = vector.load %arg6[%c0_11, %c0_12] : memref<128x2xf32, #tpu.memory_space<vmem>>, vector<128x2xf32>
    tpu.vector_store %arg6[%c0_11, %c0_12], %12 {strides = array<i32>} : memref<128x2xf32, #tpu.memory_space<vmem>>, vector<128x2xf32>,
    return
  }
  func.func @transform_0(%arg0: i32) -> (i32, i32) {
    %c0_i32 = arith.constant 0 : i32
    %c0_i32_0 = arith.constant 0 : i32
    return %arg0, %c0_i32 : i32, i32
  }
  func.func @transform_1(%arg0: i32) -> (i32, i32) {
    %c0_i32 = arith.constant 0 : i32
    %c0_i32_0 = arith.constant 0 : i32
    %c0_i32_1 = arith.constant 0 : i32
    return %c0_i32, %c0_i32_0 : i32, i32
  }
  func.func @transform_2(%arg0: i32) -> (i32, i32) {
    %c0_i32 = arith.constant 0 : i32
    %c0_i32_0 = arith.constant 0 : i32
    %c0_i32_1 = arith.constant 0 : i32
    return %c0_i32, %c0_i32_0 : i32, i32
  }
  func.func @transform_3(%arg0: i32) -> (i32, i32) {
    %c0_i32 = arith.constant 0 : i32
    %c0_i32_0 = arith.constant 0 : i32
    %c0_i32_1 = arith.constant 0 : i32
    return %c0_i32, %c0_i32_0 : i32, i32
  }
  func.func @transform_4(%arg0: i32) -> (i32, i32) {
    %c0_i32 = arith.constant 0 : i32
    %c0_i32_0 = arith.constant 0 : i32
    %c0_i32_1 = arith.constant 0 : i32
    return %c0_i32, %c0_i32_0 : i32, i32
  }
  func.func @transform_5(%arg0: i32) -> (i32, i32) {
    %c0_i32 = arith.constant 0 : i32
    %c0_i32_0 = arith.constant 0 : i32
    return %arg0, %c0_i32 : i32, i32
  }
}

</mosaic_0001>

<llo_original>
// kernel: tpu_custom_call.1
$region0: #{tpu_custom_call.1}
  #allocation0 [shape = 'u32[]', space=smem, size = 0x4, offset = 0x4, fixed_abs, tag = 'smem constant byte address 0x4 - core index']
  #allocation1 [shape = 'u32[144,128]{1,0:T(1,128)}', space=vmem, size = 0x12000, scoped, tag = 'internal scratch']
  %s0 = inlined_call_operand.vmem [shape: f32[1024,4], index: 0, kind: input, shape index: {}]
  %s1 = inlined_call_operand.vmem [shape: f32[4,128], index: 1, kind: input, shape index: {}]
  %s2 = inlined_call_operand.vmem [shape: f32[1,128], index: 2, kind: input, shape index: {}]
  %s3 = inlined_call_operand.vmem [shape: f32[128,2], index: 3, kind: input, shape index: {}]
  %s4 = inlined_call_operand.vmem [shape: f32[1,2], index: 4, kind: input, shape index: {}]
  %s5 = inlined_call_operand.vmem [shape: f32[1024,2], index: 5, kind: output, shape index: {}]
  %s6 = sld [smem:[#allocation0]]
  $region53: #{tpu_custom_call.1} parent=0
    _
  %s8 = ssub.s32 1, %s6
  %s9 = scalar_select 0, %s8, %s6
  loop: start=0, step=1, limit=10
  $region2: #{tpu_custom_call.1} parent=0 // loop_pre_header
    _
  $region3: #{tpu_custom_call.1} parent=0 // loop_header
    %s11 = sphi 0, %s15
    %p12 = scmp.ge.s32.totalorder %s11, 10
    %s21 = sphi 0, %s23
    %s24 = sphi 0, %s21
    %s25 = sphi 0, %s24
    %s41 = sphi 0, %s25
    %s45 = sphi 0, %s45
    %s47 = sphi 0, %s45
    %s48 = sphi 0, %s47
    %s62 = sphi 0, %s48
    %s66 = sphi 0, %s66
    %s68 = sphi 0, %s66
    %s69 = sphi 0, %s68
    %s83 = sphi 0, %s69
    %s87 = sphi 0, %s87
    %s89 = sphi 0, %s87
    %s90 = sphi 0, %s89
    %s104 = sphi 0, %s90
    %s108 = sphi 0, %s108
    %s110 = sphi 0, %s108
    %s111 = sphi 0, %s110
    %s125 = sphi 0, %s111
    %s131 = sphi 0, %s133
    %s134 = sphi 0, %s131
    %s135 = sphi 0, %s134
    %s151 = sphi 0, %s135
  $region4: #{tpu_custom_call.1} parent=0 // loop_header_branch
    %14 = sbr.rel (%p12) target = $region8
  $region5: #{tpu_custom_call.1} parent=0 // loop_body
    %s16 = ssub.s32 %s11, 1
    %s17 = ssub.s32 %s11, 2
    %s18 = sadd.s32 %s11, 1
    %s19 = ssub.s32 %s11, %s18
    %p20 = scmp.eq.s32.totalorder %s19, 0
    %s22 = sadd.s32 %s21, 1
    %s23 = scalar_select %p20, %s21, %s22
    %p26 = pneg %p20
    %p27 = scmp.eq.s32.totalorder %s11, 7
    %p28 = por %p26, %p27
    %p29 = scmp.ne.s32.totalorder %s21, %s24
    %p30 = scmp.eq.s32.totalorder %s11, 0
    %p31 = por %p29, %p30
    %p32 = scmp.ne.s32.totalorder %s21, %s24
    %p33 = scmp.eq.s32.totalorder %s16, 7
    %p34 = por %p32, %p33
    %p35 = scmp.ne.s32.totalorder %s24, %s25
    %p36 = scmp.eq.s32.totalorder %s16, 0
    %p37 = por %p35, %p36
    %p38 = scmp.ne.s32.totalorder %s24, %s25
    %p39 = scmp.eq.s32.totalorder %s17, 7
    %p40 = por %p38, %p39
    %p42 = scmp.ne.s32.totalorder %s25, %s41
    %p43 = scmp.eq.s32.totalorder %s17, 0
    %p44 = por %p42, %p43
    %s46 = sadd.s32 %s45, 1
    %p49 = scmp.eq.s32.totalorder %s11, 7
    %p50 = scmp.ne.s32.totalorder %s45, %s47
    %p51 = scmp.eq.s32.totalorder %s11, 0
    %p52 = por %p50, %p51
    %p53 = scmp.ne.s32.totalorder %s45, %s47
    %p54 = scmp.eq.s32.totalorder %s16, 7
    %p55 = por %p53, %p54
    %p56 = scmp.ne.s32.totalorder %s47, %s48
    %p57 = scmp.eq.s32.totalorder %s16, 0
    %p58 = por %p56, %p57
    %p59 = scmp.ne.s32.totalorder %s47, %s48
    %p60 = scmp.eq.s32.totalorder %s17, 7
    %p61 = por %p59, %p60
    %p63 = scmp.ne.s32.totalorder %s48, %s62
    %p64 = scmp.eq.s32.totalorder %s17, 0
    %p65 = por %p63, %p64
    %s67 = sadd.s32 %s66, 1
    %p70 = scmp.eq.s32.totalorder %s11, 7
    %p71 = scmp.ne.s32.totalorder %s66, %s68
    %p72 = scmp.eq.s32.totalorder %s11, 0
    %p73 = por %p71, %p72
    %p74 = scmp.ne.s32.totalorder %s66, %s68
    %p75 = scmp.eq.s32.totalorder %s16, 7
    %p76 = por %p74, %p75
    %p77 = scmp.ne.s32.totalorder %s68, %s69
    %p78 = scmp.eq.s32.totalorder %s16, 0
    %p79 = por %p77, %p78
    %p80 = scmp.ne.s32.totalorder %s68, %s69
    %p81 = scmp.eq.s32.totalorder %s17, 7
    %p82 = por %p80, %p81
    %p84 = scmp.ne.s32.totalorder %s69, %s83
    %p85 = scmp.eq.s32.totalorder %s17, 0
    %p86 = por %p84, %p85
    %s88 = sadd.s32 %s87, 1
    %p91 = scmp.eq.s32.totalorder %s11, 7
    %p92 = scmp.ne.s32.totalorder %s87, %s89
    %p93 = scmp.eq.s32.totalorder %s11, 0
    %p94 = por %p92, %p93
    %p95 = scmp.ne.s32.totalorder %s87, %s89
    %p96 = scmp.eq.s32.totalorder %s16, 7
    %p97 = por %p95, %p96
    %p98 = scmp.ne.s32.totalorder %s89, %s90
    %p99 = scmp.eq.s32.totalorder %s16, 0
    %p100 = por %p98, %p99
    %p101 = scmp.ne.s32.totalorder %s89, %s90
    %p102 = scmp.eq.s32.totalorder %s17, 7
    %p103 = por %p101, %p102
    %p105 = scmp.ne.s32.totalorder %s90, %s104
    %p106 = scmp.eq.s32.totalorder %s17, 0
    %p107 = por %p105, %p106
    %s109 = sadd.s32 %s108, 1
    %p112 = scmp.eq.s32.totalorder %s11, 7
    %p113 = scmp.ne.s32.totalorder %s108, %s110
    %p114 = scmp.eq.s32.totalorder %s11, 0
    %p115 = por %p113, %p114
    %p116 = scmp.ne.s32.totalorder %s108, %s110
    %p117 = scmp.eq.s32.totalorder %s16, 7
    %p118 = por %p116, %p117
    %p119 = scmp.ne.s32.totalorder %s110, %s111
    %p120 = scmp.eq.s32.totalorder %s16, 0
    %p121 = por %p119, %p120
    %p122 = scmp.ne.s32.totalorder %s110, %s111
    %p123 = scmp.eq.s32.totalorder %s17, 7
    %p124 = por %p122, %p123
    %p126 = scmp.ne.s32.totalorder %s111, %s125
    %p127 = scmp.eq.s32.totalorder %s17, 0
    %p128 = por %p126, %p127
    %s129 = ssub.s32 %s11, %s18
    %p130 = scmp.eq.s32.totalorder %s129, 0
    %s132 = sadd.s32 %s131, 1
    %s133 = scalar_select %p130, %s131, %s132
    %p136 = pneg %p130
    %p137 = scmp.eq.s32.totalorder %s11, 7
    %p138 = por %p136, %p137
    %p139 = scmp.ne.s32.totalorder %s131, %s134
    %p140 = scmp.eq.s32.totalorder %s11, 0
    %p141 = por %p139, %p140
    %p142 = scmp.ne.s32.totalorder %s131, %s134
    %p143 = scmp.eq.s32.totalorder %s16, 7
    %p144 = por %p142, %p143
    %p145 = scmp.ne.s32.totalorder %s134, %s135
    %p146 = scmp.eq.s32.totalorder %s16, 0
    %p147 = por %p145, %p146
    %p148 = scmp.ne.s32.totalorder %s134, %s135
    %p149 = scmp.eq.s32.totalorder %s17, 7
    %p150 = por %p148, %p149
    %p152 = scmp.ne.s32.totalorder %s135, %s151
    %p153 = scmp.eq.s32.totalorder %s17, 0
    %p154 = por %p152, %p153
    %p155 = scmp.le.s32.totalorder 1, %s11
    %p156 = scmp.lt.s32.totalorder %s11, 9
    %p157 = pnand %p155, %p156
    %p158 = pneg %p157
    // Predicated region
    $region9: #{tpu_custom_call.1} parent=5 // pred_check
      _
    $region10: #{tpu_custom_call.1} parent=5 // pred_check_branch
      %160 = sbr.rel (%p157) target = $region12
    $region11: #{tpu_custom_call.1} parent=5 // pred_region
      %s161 = ssub.s32 %s11, 1
      // Predicated region
      $region13: #{tpu_custom_call.1} parent=11 // pred_check
        %p162 = pneg %p58
      $region14: #{tpu_custom_call.1} parent=11 // pred_check_branch
        %164 = sbr.rel (%p162) target = $region16
      $region15: #{tpu_custom_call.1} parent=11 // pred_region
        _
      $region16: #{tpu_custom_call.1} parent=11 // pred_fallthru
        _
      // Predicated region
      $region17: #{tpu_custom_call.1} parent=11 // pred_check
        %p165 = pneg %p79
      $region18: #{tpu_custom_call.1} parent=11 // pred_check_branch
        %167 = sbr.rel (%p165) target = $region20
      $region19: #{tpu_custom_call.1} parent=11 // pred_region
        _
      $region20: #{tpu_custom_call.1} parent=11 // pred_fallthru
        _
      // Predicated region
      $region21: #{tpu_custom_call.1} parent=11 // pred_check
        %p168 = pneg %p100
      $region22: #{tpu_custom_call.1} parent=11 // pred_check_branch
        %170 = sbr.rel (%p168) target = $region24
      $region23: #{tpu_custom_call.1} parent=11 // pred_region
        _
      $region24: #{tpu_custom_call.1} parent=11 // pred_fallthru
        _
      // Predicated region
      $region25: #{tpu_custom_call.1} parent=11 // pred_check
        %p171 = pneg %p121
      $region26: #{tpu_custom_call.1} parent=11 // pred_check_branch
        %173 = sbr.rel (%p171) target = $region28
      $region27: #{tpu_custom_call.1} parent=11 // pred_region
        _
      $region28: #{tpu_custom_call.1} parent=11 // pred_fallthru
        _
    $region12: #{tpu_custom_call.1} parent=5 // pred_fallthru
      _
    %p174 = scmp.lt.s32.totalorder %s11, 8
    // Predicated region
    $region29: #{tpu_custom_call.1} parent=5 // pred_check
      %p175 = pneg %p174
    $region30: #{tpu_custom_call.1} parent=5 // pred_check_branch
      %177 = sbr.rel (%p175) target = $region32
    $region31: #{tpu_custom_call.1} parent=5 // pred_region
      // Predicated region
      $region33: #{tpu_custom_call.1} parent=31 // pred_check
        %p178 = pneg %p31
      $region34: #{tpu_custom_call.1} parent=31 // pred_check_branch
        %180 = sbr.rel (%p178) target = $region36
      $region35: #{tpu_custom_call.1} parent=31 // pred_region
        %s181 = smul.u32 16, %s11
        %p182 = scmp.lt.s32.totalorder %s181, 127
        %s183 = scalar_select %p182, %s181, 127
        %s184 = smul.addr %s183, 8
        %s185 = scalar_lea.vmem %s0, %s184
        %s186 = smul.u32 16, %s11
      $region36: #{tpu_custom_call.1} parent=31 // pred_fallthru
        _
    $region32: #{tpu_custom_call.1} parent=5 // pred_fallthru
      _
    %p187 = scmp.le.s32.totalorder 1, %s11
    %p188 = scmp.lt.s32.totalorder %s11, 9
    %p189 = pnand %p187, %p188
    %p190 = pneg %p189
    // Predicated region
    $region37: #{tpu_custom_call.1} parent=5 // pred_check
      _
    $region38: #{tpu_custom_call.1} parent=5 // pred_check_branch
      %192 = sbr.rel (%p189) target = $region40
    $region39: #{tpu_custom_call.1} parent=5 // pred_region
      %s193 = ssub.s32 %s11, 1
      %s194 = smul.u32 16, %s16
      %p195 = scmp.lt.s32.totalorder %s194, 127
      %s196 = scalar_select %p195, %s194, 127
      %s197 = smul.addr %s196, 8
      %s198 = scalar_lea.vmem %s0, %s197
      %p199 = pneg %p37
      %p200 = pneg %p34
      %p201 = pneg %p58
      %p202 = pneg %p55
      %p203 = pneg %p79
      %p204 = pneg %p76
      %p205 = pneg %p100
      %p206 = pneg %p97
      %p207 = pneg %p121
      %p208 = pneg %p118
      %p209 = pneg %p147
      %p210 = pneg %p144
      %s211 = smul.u32 16, %s16
      %p212 = scmp.lt.s32.totalorder %s211, 127
      %s213 = scalar_select %p212, %s211, 127
      %s214 = smul.addr %s213, 8
      %s215 = scalar_lea.vmem %s5, %s214
      %s216 = smul.u32 16, %s16
      %p217 = scmp.lt.s32.totalorder %s216, 127
      %s218 = scalar_select %p217, %s216, 127
      %s219 = smul.addr %s218, 8
      %s220 = scalar_lea.vmem %s0, %s219
      %s221 = smul.u32 16, %s16
      %s222 = smul.u32 16, %s16
      %p223 = scmp.lt.s32.totalorder %s222, 127
      %s224 = scalar_select %p223, %s222, 127
      %s225 = smul.addr %s224, 8
      %s226 = scalar_lea.vmem %s5, %s225
      %s227 = smul.u32 16, %s16
      %v228 = vld [vmem:[%s220] sm:$0xff]
      %v229 = vld [vmem:[%s220 + $0x8] sm:$0xff]
      %v230 = vld [vmem:[%s220 + $0x10] sm:$0xff]
      %v231 = vld [vmem:[%s220 + $0x18] sm:$0xff]
      %v232 = vld [vmem:[%s220 + $0x20] sm:$0xff]
      %v233 = vld [vmem:[%s220 + $0x28] sm:$0xff]
      %v234 = vld [vmem:[%s220 + $0x30] sm:$0xff]
      %v235 = vld [vmem:[%s220 + $0x38] sm:$0xff]
      %v236 = vld [vmem:[%s220 + $0x40] sm:$0xff]
      %v237 = vld [vmem:[%s220 + $0x48] sm:$0xff]
      %v238 = vld [vmem:[%s220 + $0x50] sm:$0xff]
      %v239 = vld [vmem:[%s220 + $0x58] sm:$0xff]
      %v240 = vld [vmem:[%s220 + $0x60] sm:$0xff]
      %v241 = vld [vmem:[%s220 + $0x68] sm:$0xff]
      %v242 = vld [vmem:[%s220 + $0x70] sm:$0xff]
      %v243 = vld [vmem:[%s220 + $0x78] sm:$0xff]
      %v244 = vld [vmem:[%s1] sm:$0xf]
      %v245 = vld [vmem:[%s2] sm:$0x1]
      %v247 = vlaneseq
      %v248 = vshrl.u32 %v247, 7
      %v249 = vsub.s32 0, %v248
      %v250 = vrot.slane %v245, %v249
      %vm252 = vcmask 31744
      %v254 = vsel %vm252, %v228, 0
      %v257 = vsel %vm252, %v229, 0
      %v260 = vsel %vm252, %v230, 0
      %v263 = vsel %vm252, %v231, 0
      %v266 = vsel %vm252, %v232, 0
      %v269 = vsel %vm252, %v233, 0
      %v272 = vsel %vm252, %v234, 0
      %v275 = vsel %vm252, %v235, 0
      %v278 = vsel %vm252, %v236, 0
      %v281 = vsel %vm252, %v237, 0
      %v284 = vsel %vm252, %v238, 0
      %v287 = vsel %vm252, %v239, 0
      %v290 = vsel %vm252, %v240, 0
      %v293 = vsel %vm252, %v241, 0
      %v296 = vsel %vm252, %v242, 0
      %v299 = vsel %vm252, %v243, 0
      %vm301 = vcmask 1043456
      %v303 = vsel %vm301, %v244, 0
      %305 = vmatprep.subr.mxu0 0.0
      %306 = vmatpush1.msra.mxu0 %v303
      %307 = vmatprep.subr.mxu0 0.0
      %308 = vmatpush1.msra.mxu0 0.0
      %309 = vmatprep.subr.mxu0 0.0
      %310 = vmatpush1.msra.mxu0 0.0
      %311 = vmatprep.subr.mxu0 0.0
      %312 = vmatpush1.msra.mxu0 0.0
      %313 = vmatprep.subr.mxu0 0.0
      %314 = vmatpush1.msra.mxu0 0.0
      %315 = vmatprep.subr.mxu0 0.0
      %316 = vmatpush1.msra.mxu0 0.0
      %317 = vmatprep.subr.mxu0 0.0
      %318 = vmatpush1.msra.mxu0 0.0
      %319 = vmatprep.subr.mxu0 0.0
      %320 = vmatpush1.msra.mxu0 0.0
      %321 = vmatprep.subr.mxu0 0.0
      %322 = vmatpush1.msra.mxu0 0.0
      %323 = vmatprep.subr.mxu0 0.0
      %324 = vmatpush1.msra.mxu0 0.0
      %325 = vmatprep.subr.mxu0 0.0
      %326 = vmatpush1.msra.mxu0 0.0
      %327 = vmatprep.subr.mxu0 0.0
      %328 = vmatpush1.msra.mxu0 0.0
      %329 = vmatprep.subr.mxu0 0.0
      %330 = vmatpush1.msra.mxu0 0.0
      %331 = vmatprep.subr.mxu0 0.0
      %332 = vmatpush1.msra.mxu0 0.0
      %333 = vmatprep.subr.mxu0 0.0
      %334 = vmatpush1.msra.mxu0 0.0
      %335 = vmatprep.subr.mxu0 0.0
      %336 = vmatpush1.msra.mxu0 0.0
      %337 = vmatprep.subr.mxu0 0.0
      %338 = vmatpush1.msra.mxu0 0.0
      %339 = vmatprep.subr.mxu0 0.0
      %340 = vmatpush1.msra.mxu0 0.0
      %341 = vmatprep.subr.mxu0 0.0
      %342 = vmatpush1.msra.mxu0 0.0
      %343 = vmatprep.subr.mxu0 0.0
      %344 = vmatpush1.msra.mxu0 0.0
      %345 = vmatprep.subr.mxu0 0.0
      %346 = vmatpush1.msra.mxu0 0.0
      %347 = vmatprep.subr.mxu0 0.0
      %348 = vmatpush1.msra.mxu0 0.0
      %349 = vmatprep.subr.mxu0 0.0
      %350 = vmatpush1.msra.mxu0 0.0
      %351 = vmatprep.subr.mxu0 0.0
      %352 = vmatpush1.msra.mxu0 0.0
      %353 = vmatprep.subr.mxu0 0.0
      %354 = vmatpush1.msra.mxu0 0.0
      %355 = vmatprep.subr.mxu0 0.0
      %356 = vmatpush1.msra.mxu0 0.0
      %357 = vmatprep.subr.mxu0 0.0
      %358 = vmatpush1.msra.mxu0 0.0
      %359 = vmatprep.subr.mxu0 0.0
      %360 = vmatpush1.msra.mxu0 0.0
      %361 = vmatprep.subr.mxu0 0.0
      %362 = vmatpush1.msra.mxu0 0.0
      %363 = vmatprep.subr.mxu0 0.0
      %364 = vmatpush1.msra.mxu0 0.0
      %365 = vmatprep.subr.mxu0 0.0
      %366 = vmatpush1.msra.mxu0 0.0
      %367 = vmatprep.subr.mxu0 0.0
      %368 = vmatpush1.msra.mxu0 0.0
      %369 = vmatprep.mubr.f32.mxu0 0.0
      %370 = vmatmul.mubr.f32.gmra.mrb[0].mxu0 %v254
      %v371 = vpop.f32.mrb[0].mxu0
      %v372 = vadd.f32 %v250, %v371
      %v373 = vpop.f32.mrb[0].mxu0
      %374 = vmatprep.mubr.f32.mxu0 0.0
      %375 = vmatmul.mubr.f32.gmra.mrb[0].mxu0 %v257
      %v376 = vpop.f32.mrb[0].mxu0
      %v377 = vadd.f32 %v250, %v376
      %v378 = vpop.f32.mrb[0].mxu0
      %379 = vmatprep.mubr.f32.mxu0 0.0
      %380 = vmatmul.mubr.f32.gmra.mrb[0].mxu0 %v260
      %v381 = vpop.f32.mrb[0].mxu0
      %v382 = vadd.f32 %v250, %v381
      %v383 = vpop.f32.mrb[0].mxu0
      %384 = vmatprep.mubr.f32.mxu0 0.0
      %385 = vmatmul.mubr.f32.gmra.mrb[0].mxu0 %v263
      %v386 = vpop.f32.mrb[0].mxu0
      %v387 = vadd.f32 %v250, %v386
      %v388 = vpop.f32.mrb[0].mxu0
      %389 = vmatprep.mubr.f32.mxu0 0.0
      %390 = vmatmul.mubr.f32.gmra.mrb[0].mxu0 %v266
      %v391 = vpop.f32.mrb[0].mxu0
      %v392 = vadd.f32 %v250, %v391
      %v393 = vpop.f32.mrb[0].mxu0
      %394 = vmatprep.mubr.f32.mxu0 0.0
      %395 = vmatmul.mubr.f32.gmra.mrb[0].mxu0 %v269
      %v396 = vpop.f32.mrb[0].mxu0
      %v397 = vadd.f32 %v250, %v396
      %v398 = vpop.f32.mrb[0].mxu0
      %399 = vmatprep.mubr.f32.mxu0 0.0
      %400 = vmatmul.mubr.f32.gmra.mrb[0].mxu0 %v272
      %v401 = vpop.f32.mrb[0].mxu0
      %v402 = vadd.f32 %v250, %v401
      %v403 = vpop.f32.mrb[0].mxu0
      %404 = vmatprep.mubr.f32.mxu0 0.0
      %405 = vmatmul.mubr.f32.gmra.mrb[0].mxu0 %v275
      %v406 = vpop.f32.mrb[0].mxu0
      %v407 = vadd.f32 %v250, %v406
      %v408 = vpop.f32.mrb[0].mxu0
      %409 = vmatprep.mubr.f32.mxu0 0.0
      %410 = vmatmul.mubr.f32.gmra.mrb[0].mxu0 %v278
      %v411 = vpop.f32.mrb[0].mxu0
      %v412 = vadd.f32 %v250, %v411
      %v413 = vpop.f32.mrb[0].mxu0
      %414 = vmatprep.mubr.f32.mxu0 0.0
      %415 = vmatmul.mubr.f32.gmra.mrb[0].mxu0 %v281
      %v416 = vpop.f32.mrb[0].mxu0
      %v417 = vadd.f32 %v250, %v416
      %v418 = vpop.f32.mrb[0].mxu0
      %419 = vmatprep.mubr.f32.mxu0 0.0
      %420 = vmatmul.mubr.f32.gmra.mrb[0].mxu0 %v284
      %v421 = vpop.f32.mrb[0].mxu0
      %v422 = vadd.f32 %v250, %v421
      %v423 = vpop.f32.mrb[0].mxu0
      %424 = vmatprep.mubr.f32.mxu0 0.0
      %425 = vmatmul.mubr.f32.gmra.mrb[0].mxu0 %v287
      %v426 = vpop.f32.mrb[0].mxu0
      %v427 = vadd.f32 %v250, %v426
      %v428 = vpop.f32.mrb[0].mxu0
      %429 = vmatprep.mubr.f32.mxu0 0.0
      %430 = vmatmul.mubr.f32.gmra.mrb[0].mxu0 %v290
      %v431 = vpop.f32.mrb[0].mxu0
      %v432 = vadd.f32 %v250, %v431
      %v433 = vpop.f32.mrb[0].mxu0
      %434 = vmatprep.mubr.f32.mxu0 0.0
      %435 = vmatmul.mubr.f32.gmra.mrb[0].mxu0 %v293
      %v436 = vpop.f32.mrb[0].mxu0
      %v437 = vadd.f32 %v250, %v436
      %v438 = vpop.f32.mrb[0].mxu0
      %439 = vmatprep.mubr.f32.mxu0 0.0
      %440 = vmatmul.mubr.f32.gmra.mrb[0].mxu0 %v296
      %v441 = vpop.f32.mrb[0].mxu0
      %v442 = vadd.f32 %v250, %v441
      %v443 = vpop.f32.mrb[0].mxu0
      %444 = vmatprep.mubr.f32.mxu0 0.0
      %445 = vmatmul.mubr.f32.gmra.mrb[0].mxu0 %v299
      %v446 = vpop.f32.mrb[0].mxu0
      %v447 = vadd.f32 %v250, %v446
      %v448 = vpop.f32.mrb[0].mxu0
      %449 = vdwg.mxu0
      %v450 = vmax.f32 %v372, 0.0
      %v451 = vmax.f32 %v377, 0.0
      %v452 = vmax.f32 %v382, 0.0
      %v453 = vmax.f32 %v387, 0.0
      %v454 = vmax.f32 %v392, 0.0
      %v455 = vmax.f32 %v397, 0.0
      %v456 = vmax.f32 %v402, 0.0
      %v457 = vmax.f32 %v407, 0.0
      %v458 = vmax.f32 %v412, 0.0
      %v459 = vmax.f32 %v417, 0.0
      %v460 = vmax.f32 %v422, 0.0
      %v461 = vmax.f32 %v427, 0.0
      %v462 = vmax.f32 %v432, 0.0
      %v463 = vmax.f32 %v437, 0.0
      %v464 = vmax.f32 %v442, 0.0
      %v465 = vmax.f32 %v447, 0.0
      %v466 = vld [vmem:[%s3] sm:$0xff]
      %v467 = vld [vmem:[%s3 + $0x8] sm:$0xff]
      %v468 = vld [vmem:[%s3 + $0x10] sm:$0xff]
      %v469 = vld [vmem:[%s3 + $0x18] sm:$0xff]
      %v470 = vld [vmem:[%s3 + $0x20] sm:$0xff]
      %v471 = vld [vmem:[%s3 + $0x28] sm:$0xff]
      %v472 = vld [vmem:[%s3 + $0x30] sm:$0xff]
      %v473 = vld [vmem:[%s3 + $0x38] sm:$0xff]
      %v474 = vld [vmem:[%s3 + $0x40] sm:$0xff]
      %v475 = vld [vmem:[%s3 + $0x48] sm:$0xff]
      %v476 = vld [vmem:[%s3 + $0x50] sm:$0xff]
      %v477 = vld [vmem:[%s3 + $0x58] sm:$0xff]
      %v478 = vld [vmem:[%s3 + $0x60] sm:$0xff]
      %v479 = vld [vmem:[%s3 + $0x68] sm:$0xff]
      %v480 = vld [vmem:[%s3 + $0x70] sm:$0xff]
      %v481 = vld [vmem:[%s3 + $0x78] sm:$0xff]
      %v482 = vld [vmem:[%s4] sm:$0x1]
      %v484 = vlaneseq
      %v485 = vshrl.u32 %v484, 7
      %v486 = vsub.s32 0, %v485
      %v487 = vrot.slane %v482, %v486
      %489 = vmatprep.subr.mxu0 0.0
      %490 = vmatpush1.msra.mxu0 %v466
      %491 = vmatprep.subr.mxu0 0.0
      %492 = vmatpush1.msra.mxu0 %v467
      %493 = vmatprep.subr.mxu0 0.0
      %494 = vmatpush1.msra.mxu0 %v468
      %495 = vmatprep.subr.mxu0 0.0
      %496 = vmatpush1.msra.mxu0 %v469
      %497 = vmatprep.subr.mxu0 0.0
      %498 = vmatpush1.msra.mxu0 %v470
      %499 = vmatprep.subr.mxu0 0.0
      %500 = vmatpush1.msra.mxu0 %v471
      %501 = vmatprep.subr.mxu0 0.0
      %502 = vmatpush1.msra.mxu0 %v472
      %503 = vmatprep.subr.mxu0 0.0
      %504 = vmatpush1.msra.mxu0 %v473
      %505 = vmatprep.subr.mxu0 0.0
      %506 = vmatpush1.msra.mxu0 %v474
      %507 = vmatprep.subr.mxu0 0.0
      %508 = vmatpush1.msra.mxu0 %v475
      %509 = vmatprep.subr.mxu0 0.0
      %510 = vmatpush1.msra.mxu0 %v476
      %511 = vmatprep.subr.mxu0 0.0
      %512 = vmatpush1.msra.mxu0 %v477
      %513 = vmatprep.subr.mxu0 0.0
      %514 = vmatpush1.msra.mxu0 %v478
      %515 = vmatprep.subr.mxu0 0.0
      %516 = vmatpush1.msra.mxu0 %v479
      %517 = vmatprep.subr.mxu0 0.0
      %518 = vmatpush1.msra.mxu0 %v480
      %519 = vmatprep.subr.mxu0 0.0
      %520 = vmatpush1.msra.mxu0 %v481
      %521 = vmatprep.subr.mxu0 0.0
      %522 = vmatpush1.msra.mxu0 0.0
      %523 = vmatprep.subr.mxu0 0.0
      %524 = vmatpush1.msra.mxu0 0.0
      %525 = vmatprep.subr.mxu0 0.0
      %526 = vmatpush1.msra.mxu0 0.0
      %527 = vmatprep.subr.mxu0 0.0
      %528 = vmatpush1.msra.mxu0 0.0
      %529 = vmatprep.subr.mxu0 0.0
      %530 = vmatpush1.msra.mxu0 0.0
      %531 = vmatprep.subr.mxu0 0.0
      %532 = vmatpush1.msra.mxu0 0.0
      %533 = vmatprep.subr.mxu0 0.0
      %534 = vmatpush1.msra.mxu0 0.0
      %535 = vmatprep.subr.mxu0 0.0
      %536 = vmatpush1.msra.mxu0 0.0
      %537 = vmatprep.subr.mxu0 0.0
      %538 = vmatpush1.msra.mxu0 0.0
      %539 = vmatprep.subr.mxu0 0.0
      %540 = vmatpush1.msra.mxu0 0.0
      %541 = vmatprep.subr.mxu0 0.0
      %542 = vmatpush1.msra.mxu0 0.0
      %543 = vmatprep.subr.mxu0 0.0
      %544 = vmatpush1.msra.mxu0 0.0
      %545 = vmatprep.subr.mxu0 0.0
      %546 = vmatpush1.msra.mxu0 0.0
      %547 = vmatprep.subr.mxu0 0.0
      %548 = vmatpush1.msra.mxu0 0.0
      %549 = vmatprep.subr.mxu0 0.0
      %550 = vmatpush1.msra.mxu0 0.0
      %551 = vmatprep.subr.mxu0 0.0
      %552 = vmatpush1.msra.mxu0 0.0
      %553 = vmatprep.mubr.f32.mxu0 0.0
      %554 = vmatmul.mubr.f32.gmra.mrb[0].mxu0 %v450
      %v555 = vpop.f32.mrb[0].mxu0
      %v556 = vadd.f32 %v487, %v555
      %v557 = vpop.f32.mrb[0].mxu0
      %558 = vmatprep.mubr.f32.mxu0 0.0
      %559 = vmatmul.mubr.f32.gmra.mrb[0].mxu0 %v451
      %v560 = vpop.f32.mrb[0].mxu0
      %v561 = vadd.f32 %v487, %v560
      %v562 = vpop.f32.mrb[0].mxu0
      %563 = vmatprep.mubr.f32.mxu0 0.0
      %564 = vmatmul.mubr.f32.gmra.mrb[0].mxu0 %v452
      %v565 = vpop.f32.mrb[0].mxu0
      %v566 = vadd.f32 %v487, %v565
      %v567 = vpop.f32.mrb[0].mxu0
      %568 = vmatprep.mubr.f32.mxu0 0.0
      %569 = vmatmul.mubr.f32.gmra.mrb[0].mxu0 %v453
      %v570 = vpop.f32.mrb[0].mxu0
      %v571 = vadd.f32 %v487, %v570
      %v572 = vpop.f32.mrb[0].mxu0
      %573 = vmatprep.mubr.f32.mxu0 0.0
      %574 = vmatmul.mubr.f32.gmra.mrb[0].mxu0 %v454
      %v575 = vpop.f32.mrb[0].mxu0
      %v576 = vadd.f32 %v487, %v575
      %v577 = vpop.f32.mrb[0].mxu0
      %578 = vmatprep.mubr.f32.mxu0 0.0
      %579 = vmatmul.mubr.f32.gmra.mrb[0].mxu0 %v455
      %v580 = vpop.f32.mrb[0].mxu0
      %v581 = vadd.f32 %v487, %v580
      %v582 = vpop.f32.mrb[0].mxu0
      %583 = vmatprep.mubr.f32.mxu0 0.0
      %584 = vmatmul.mubr.f32.gmra.mrb[0].mxu0 %v456
      %v585 = vpop.f32.mrb[0].mxu0
      %v586 = vadd.f32 %v487, %v585
      %v587 = vpop.f32.mrb[0].mxu0
      %588 = vmatprep.mubr.f32.mxu0 0.0
      %589 = vmatmul.mubr.f32.gmra.mrb[0].mxu0 %v457
      %v590 = vpop.f32.mrb[0].mxu0
      %v591 = vadd.f32 %v487, %v590
      %v592 = vpop.f32.mrb[0].mxu0
      %593 = vmatprep.mubr.f32.mxu0 0.0
      %594 = vmatmul.mubr.f32.gmra.mrb[0].mxu0 %v458
      %v595 = vpop.f32.mrb[0].mxu0
      %v596 = vadd.f32 %v487, %v595
      %v597 = vpop.f32.mrb[0].mxu0
      %598 = vmatprep.mubr.f32.mxu0 0.0
      %599 = vmatmul.mubr.f32.gmra.mrb[0].mxu0 %v459
      %v600 = vpop.f32.mrb[0].mxu0
      %v601 = vadd.f32 %v487, %v600
      %v602 = vpop.f32.mrb[0].mxu0
      %603 = vmatprep.mubr.f32.mxu0 0.0
      %604 = vmatmul.mubr.f32.gmra.mrb[0].mxu0 %v460
      %v605 = vpop.f32.mrb[0].mxu0
      %v606 = vadd.f32 %v487, %v605
      %v607 = vpop.f32.mrb[0].mxu0
      %608 = vmatprep.mubr.f32.mxu0 0.0
      %609 = vmatmul.mubr.f32.gmra.mrb[0].mxu0 %v461
      %v610 = vpop.f32.mrb[0].mxu0
      %v611 = vadd.f32 %v487, %v610
      %v612 = vpop.f32.mrb[0].mxu0
      %613 = vmatprep.mubr.f32.mxu0 0.0
      %614 = vmatmul.mubr.f32.gmra.mrb[0].mxu0 %v462
      %v615 = vpop.f32.mrb[0].mxu0
      %v616 = vadd.f32 %v487, %v615
      %v617 = vpop.f32.mrb[0].mxu0
      %618 = vmatprep.mubr.f32.mxu0 0.0
      %619 = vmatmul.mubr.f32.gmra.mrb[0].mxu0 %v463
      %v620 = vpop.f32.mrb[0].mxu0
      %v621 = vadd.f32 %v487, %v620
      %v622 = vpop.f32.mrb[0].mxu0
      %623 = vmatprep.mubr.f32.mxu0 0.0
      %624 = vmatmul.mubr.f32.gmra.mrb[0].mxu0 %v464
      %v625 = vpop.f32.mrb[0].mxu0
      %v626 = vadd.f32 %v487, %v625
      %v627 = vpop.f32.mrb[0].mxu0
      %628 = vmatprep.mubr.f32.mxu0 0.0
      %629 = vmatmul.mubr.f32.gmra.mrb[0].mxu0 %v465
      %v630 = vpop.f32.mrb[0].mxu0
      %v631 = vadd.f32 %v487, %v630
      %v632 = vpop.f32.mrb[0].mxu0
      %633 = vdwg.mxu0
      %vm634 = vcmask 15360
      %635 = vst.msk [vmem:[%s226] sm:$0xff] %vm634, %v556
      %636 = vst.msk [vmem:[%s226 + $0x8] sm:$0xff] %vm634, %v561
      %637 = vst.msk [vmem:[%s226 + $0x10] sm:$0xff] %vm634, %v566
      %638 = vst.msk [vmem:[%s226 + $0x18] sm:$0xff] %vm634, %v571
      %639 = vst.msk [vmem:[%s226 + $0x20] sm:$0xff] %vm634, %v576
      %640 = vst.msk [vmem:[%s226 + $0x28] sm:$0xff] %vm634, %v581
      %641 = vst.msk [vmem:[%s226 + $0x30] sm:$0xff] %vm634, %v586
      %642 = vst.msk [vmem:[%s226 + $0x38] sm:$0xff] %vm634, %v591
      %643 = vst.msk [vmem:[%s226 + $0x40] sm:$0xff] %vm634, %v596
      %644 = vst.msk [vmem:[%s226 + $0x48] sm:$0xff] %vm634, %v601
      %645 = vst.msk [vmem:[%s226 + $0x50] sm:$0xff] %vm634, %v606
      %646 = vst.msk [vmem:[%s226 + $0x58] sm:$0xff] %vm634, %v611
      %647 = vst.msk [vmem:[%s226 + $0x60] sm:$0xff] %vm634, %v616
      %648 = vst.msk [vmem:[%s226 + $0x68] sm:$0xff] %vm634, %v621
      %649 = vst.msk [vmem:[%s226 + $0x70] sm:$0xff] %vm634, %v626
      %650 = vst.msk [vmem:[%s226 + $0x78] sm:$0xff] %vm634, %v631
      %s651 = smul.u32 16, %s16
      %p652 = scmp.lt.s32.totalorder %s651, 127
      %s653 = scalar_select %p652, %s651, 127
      %s654 = smul.addr %s653, 8
      %s655 = scalar_lea.vmem %s5, %s654
      // Predicated region
      $region41: #{tpu_custom_call.1} parent=39 // pred_check
        %p656 = pneg %p144
      $region42: #{tpu_custom_call.1} parent=39 // pred_check_branch
        %658 = sbr.rel (%p656) target = $region44
      $region43: #{tpu_custom_call.1} parent=39 // pred_region
        %s659 = smul.u32 16, %s16
      $region44: #{tpu_custom_call.1} parent=39 // pred_fallthru
        _
    $region40: #{tpu_custom_call.1} parent=5 // pred_fallthru
      _
    %p660 = scmp.le.s32.totalorder 2, %s11
    // Predicated region
    $region45: #{tpu_custom_call.1} parent=5 // pred_check
      %p661 = pneg %p660
    $region46: #{tpu_custom_call.1} parent=5 // pred_check_branch
      %663 = sbr.rel (%p661) target = $region48
    $region47: #{tpu_custom_call.1} parent=5 // pred_region
      %s664 = ssub.s32 %s11, 2
      // Predicated region
      $region49: #{tpu_custom_call.1} parent=47 // pred_check
        %p665 = pneg %p150
      $region50: #{tpu_custom_call.1} parent=47 // pred_check_branch
        %667 = sbr.rel (%p665) target = $region52
      $region51: #{tpu_custom_call.1} parent=47 // pred_region
        %s668 = smul.u32 16, %s17
        %p669 = scmp.lt.s32.totalorder %s668, 127
        %s670 = scalar_select %p669, %s668, 127
        %s671 = smul.addr %s670, 8
        %s672 = scalar_lea.vmem %s5, %s671
      $region52: #{tpu_custom_call.1} parent=47 // pred_fallthru
        _
    $region48: #{tpu_custom_call.1} parent=5 // pred_fallthru
      _
  $region6: #{tpu_custom_call.1} parent=0 // loop_footer
    %s15 = sadd.s32 1, %s11
  $region7: #{tpu_custom_call.1} parent=0 // loop_footer_branch
    %10 = sbr.rel target = $region3
  $region8: #{tpu_custom_call.1} parent=0 // loop_exit
    _

</llo_original>
